<compile_context>
chip_gen: v5e
topology: v5e:2x2
jax: 0.10.0
libtpu: 0.0.40
codegen_flags: <defaults>
</compile_context>

<pallas_src>
import functools
import math

import jax
import jax.numpy as jnp
import numpy as np
from jax.experimental import pallas as pl
from jax.experimental.pallas import tpu as pltpu

NEG_BIG = 1e10        # mask bias, matches the PyTorch module
EXP_CLAMP = 1.0e4     # exp(-1e4) == 0.0 in f32; keeps EUP exp inputs in range


def _round_up(x, m):
    return ((x + m - 1) // m) * m


def _cqa_kernel(c_ref, q_ref, cm_ref, qm_ref, a_ref, *, inv_sqrt_d):
    c = c_ref[...]                               # (tm, D)  native dtype
    q = q_ref[...]                               # (Lq, D)  native dtype
    cm = cm_ref[...]                             # (tm, 1)  f32
    qm = qm_ref[...]                             # (1, Lq)  f32

    # Similarity on the MXU (contract feature dim of both; no explicit transpose).
    s = jax.lax.dot_general(
        c, q, (((1,), (1,)), ((), ())),
        preferred_element_type=jnp.float32) * inv_sqrt_d          # (tm, Lq)

    # masked_S = S - 1e10 * (1 - c_mask ⊗ q_mask)
    s = s - NEG_BIG * (1.0 - cm * qm)

    # Row-wise numerically-stable softmax over Lq.
    m = jnp.max(s, axis=-1, keepdims=True)
    e = jnp.exp(jnp.maximum(s - m, -EXP_CLAMP))
    denom = jnp.sum(e, axis=-1, keepdims=True)                     # >= 1 always
    p = e * pl.reciprocal(denom, approx=True)

    # A = softmax(S) @ Q   (original, un-normalized Q).
    a = jnp.dot(p.astype(q.dtype), q, preferred_element_type=jnp.float32)
    a_ref[...] = a.astype(a_ref.dtype)


def _cqa_pallas(C, Q, c_mask, q_mask, *, block_m=512):
    """Canonical problem: C (B, M, D), Q (B, Lq, D), c_mask (B, M), q_mask (B, Lq)."""
    B, M, D = C.shape
    _, Lq, _ = Q.shape
    out_dtype = jnp.result_type(C.dtype, Q.dtype)

    # Tile the row (M) axis; pad so the tile divides evenly. Padded rows carry a
    # zero mask -> fully-masked softmax -> finite output, sliced off afterwards.
    tm = min(block_m, _round_up(M, 8))
    Mp = _round_up(M, tm)
    if Mp != M:
        C = jnp.pad(C, ((0, 0), (0, Mp - M), (0, 0)))
        c_mask = jnp.pad(c_mask, ((0, 0), (0, Mp - M)))

    cm = c_mask.reshape(B, Mp, 1).astype(jnp.float32)
    qm = q_mask.reshape(B, 1, Lq).astype(jnp.float32)

    grid = (B, Mp // tm)
    kernel = functools.partial(_cqa_kernel, inv_sqrt_d=1.0 / math.sqrt(D))

    out = pl.pallas_call(
        kernel,
        grid_spec=pltpu.PrefetchScalarGridSpec(
            num_scalar_prefetch=0,
            grid=grid,
            in_specs=[
                pl.BlockSpec((None, tm, D), lambda b, i: (b, i, 0)),   # C tile
                pl.BlockSpec((None, Lq, D), lambda b, i: (b, 0, 0)),   # Q (constant over i)
                pl.BlockSpec((None, tm, 1), lambda b, i: (b, i, 0)),   # c_mask tile
                pl.BlockSpec((None, 1, Lq), lambda b, i: (b, 0, 0)),   # q_mask (constant over i)
            ],
            out_specs=pl.BlockSpec((None, tm, D), lambda b, i: (b, i, 0)),
        ),
        out_shape=jax.ShapeDtypeStruct((B, Mp, D), out_dtype),
        compiler_params=pltpu.CompilerParams(
            dimension_semantics=("parallel", "parallel")),
    )(C, Q, cm, qm)

    return out[:, :M, :]


def context_query_attention(C, Q, c_mask, q_mask):
    """Pallas implementation of ContextQueryAttention.forward (eval mode).

    C: (N, *, Lc, D), Q: (N, *, Lq, D), c_mask: (N, *, Lc), q_mask: (N, *, Lq);
    '*' dims broadcast (singletons allowed).  Returns A: (N, *, Lc, D).
    """
    C = jnp.asarray(C); Q = jnp.asarray(Q)
    c_mask = jnp.asarray(c_mask); q_mask = jnp.asarray(q_mask)

    *c_lead, Lc, D = C.shape
    *q_lead, Lq, Dq = Q.shape
    assert D == Dq, "feature dims of C and Q must match"

    lead = jnp.broadcast_shapes(tuple(c_lead), tuple(q_lead))

    C = jnp.broadcast_to(C, (*lead, Lc, D))
    cm = jnp.broadcast_to(c_mask, (*lead, Lc))

    q_lead_aligned = (1,) * (len(lead) - len(q_lead)) + tuple(q_lead)
    Qa = Q.reshape((*q_lead_aligned, Lq, D))
    qma = q_mask.reshape((*q_lead_aligned, Lq))

    # Fold the trailing lead dims over which Q is broadcast into the M axis
    # (free reshape, bigger MXU M, single Q fetch per batch).
    g = 1
    k = len(lead)
    while k > 0 and q_lead_aligned[k - 1] == 1:
        g *= lead[k - 1]
        k -= 1
    prefix = tuple(lead[:k])

    Qb = jnp.broadcast_to(Qa, (*prefix, *([1] * (len(lead) - k)), Lq, D))
    qmb = jnp.broadcast_to(qma, (*prefix, *([1] * (len(lead) - k)), Lq))

    B = int(np.prod(prefix)) if prefix else 1
    M = g * Lc

    A = _cqa_pallas(
        C.reshape(B, M, D),
        Qb.reshape(B, Lq, D),
        cm.reshape(B, M),
        qmb.reshape(B, Lq),
    )
    return A.reshape(*lead, Lc, D)


def _reference(C, Q, c_mask, q_mask):
    """Pure-JAX reference mirroring the PyTorch forward (eval mode)."""
    hp = jax.lax.Precision.HIGHEST
    D = C.shape[-1]
    S_mask = jnp.matmul(c_mask[..., :, None], q_mask[..., None, :])
    S = jnp.matmul(C, jnp.swapaxes(Q, -1, -2), precision=hp) / jnp.sqrt(jnp.float32(D))
    masked_S = S - NEG_BIG * (1.0 - S_mask)
    S_ = jax.nn.softmax(masked_S, axis=-1)
    return jnp.matmul(S_, Q, precision=hp)


if __name__ == "__main__":
    # Small shapes consistent with the module docstring: C (N,*,Lc,D), Q (N,*,Lq,D)
    # with a broadcast '*' dim for Q.
    N, G, Lc, Lq, D = 2, 4, 16, 8, 32

    key = jax.random.PRNGKey(0)
    kc, kq, kcm, kqm = jax.random.split(key, 4)
    C = jax.random.normal(kc, (N, G, Lc, D), dtype=jnp.float32)
    Q = jax.random.normal(kq, (N, 1, Lq, D), dtype=jnp.float32)
    c_mask = (jax.random.uniform(kcm, (N, G, Lc)) < 0.8).astype(jnp.float32)
    q_mask = (jax.random.uniform(kqm, (N, 1, Lq)) < 0.8).astype(jnp.float32)

    A = context_query_attention(C, Q, c_mask, q_mask)
    jax.block_until_ready(A)

    A_ref = _reference(C, Q, c_mask, q_mask)
    np.testing.assert_allclose(np.asarray(A), np.asarray(A_ref), rtol=2e-2, atol=2e-2)

    print("KERNEL_OK")
</pallas_src>

<mosaic_0001>
module attributes {stable_mosaic.version = 11 : i64} {
  func.func @_cqa_kernel(%arg0: i32, %arg1: i32, %arg2: memref<1x64x32xf32, #tpu.memory_space<vmem>>, %arg3: memref<1x8x32xf32, #tpu.memory_space<vmem>>, %arg4: memref<1x64x1xf32, #tpu.memory_space<vmem>>, %arg5: memref<1x1x8xf32, #tpu.memory_space<vmem>>, %arg6: memref<1x64x32xf32, #tpu.memory_space<vmem>>) attributes {dimension_semantics = [#tpu.dimension_semantics<parallel>, #tpu.dimension_semantics<parallel>], iteration_bounds = array<i64: 2, 1>, scalar_prefetch = 0 : i64, scratch_operands = 0 : i64, tpu.core_type = #tpu.core_type<tc>, window_params = [{transform_indices = @transform_0, window_bounds = array<i64: 1, 64, 32>}, {transform_indices = @transform_1, window_bounds = array<i64: 1, 8, 32>}, {transform_indices = @transform_2, window_bounds = array<i64: 1, 64, 1>}, {transform_indices = @transform_3, window_bounds = array<i64: 1, 1, 8>}, {transform_indices = @transform_4, window_bounds = array<i64: 1, 64, 32>}]} {
    %c0 = arith.constant 0 : index
    %c0_0 = arith.constant 0 : index
    %c0_1 = arith.constant 0 : index
    %0 = vector.load %arg2[%c0, %c0_0, %c0_1] : memref<1x64x32xf32, #tpu.memory_space<vmem>>, vector<1x64x32xf32>
    %1 = vector.shape_cast %0 : vector<1x64x32xf32> to vector<64x32xf32>
    %c0_2 = arith.constant 0 : index
    %c0_3 = arith.constant 0 : index
    %c0_4 = arith.constant 0 : index
    %2 = vector.load %arg3[%c0_2, %c0_3, %c0_4] : memref<1x8x32xf32, #tpu.memory_space<vmem>>, vector<1x8x32xf32>
    %3 = vector.shape_cast %2 : vector<1x8x32xf32> to vector<8x32xf32>
    %c0_5 = arith.constant 0 : index
    %c0_6 = arith.constant 0 : index
    %c0_7 = arith.constant 0 : index
    %4 = vector.load %arg4[%c0_5, %c0_6, %c0_7] : memref<1x64x1xf32, #tpu.memory_space<vmem>>, vector<1x64x1xf32>
    %5 = vector.shape_cast %4 : vector<1x64x1xf32> to vector<64x1xf32>
    %c0_8 = arith.constant 0 : index
    %c0_9 = arith.constant 0 : index
    %c0_10 = arith.constant 0 : index
    %6 = vector.load %arg5[%c0_8, %c0_9, %c0_10] : memref<1x1x8xf32, #tpu.memory_space<vmem>>, vector<1x1x8xf32>
    %7 = vector.shape_cast %6 : vector<1x1x8xf32> to vector<1x8xf32>
    %cst = arith.constant dense<0.000000e+00> : vector<64x8xf32>
    %8 = tpu.matmul %1, %3, %cst {dimension_numbers = #tpu.dot_dimension_numbers<[1], [1], [0], [0], [0, 0, 1, 0], [], []>} : vector<64x32xf32>, vector<8x32xf32>, vector<64x8xf32> -> vector<64x8xf32>
    %cst_11 = arith.constant 0.176776692 : f32
    %9 = vector.broadcast %cst_11 : f32 to vector<64x8xf32>
    %10 = arith.mulf %8, %9 : vector<64x8xf32>
    %11 = vector.broadcast %5 : vector<64x1xf32> to vector<64x8xf32>
    %12 = vector.broadcast %7 : vector<1x8xf32> to vector<64x8xf32>
    %13 = arith.mulf %11, %12 : vector<64x8xf32>
    %cst_12 = arith.constant 1.000000e+00 : f32
    %14 = vector.broadcast %cst_12 : f32 to vector<64x8xf32>
    %15 = arith.subf %14, %13 : vector<64x8xf32>
    %cst_13 = arith.constant 1.000000e+10 : f32
    %16 = vector.broadcast %cst_13 : f32 to vector<64x8xf32>
    %17 = arith.mulf %16, %15 : vector<64x8xf32>
    %18 = arith.subf %10, %17 : vector<64x8xf32>
    %cst_14 = arith.constant dense<0xFF800000> : vector<64xf32>
    %19 = vector.multi_reduction <maximumf>, %18, %cst_14 [1] : vector<64x8xf32> to vector<64xf32>
    %20 = vector.shape_cast %19 : vector<64xf32> to vector<64x1xf32>
    %21 = vector.broadcast %20 : vector<64x1xf32> to vector<64x8xf32>
    %22 = arith.subf %18, %21 : vector<64x8xf32>
    %cst_15 = arith.constant -1.000000e+04 : f32
    %23 = vector.broadcast %cst_15 : f32 to vector<64x8xf32>
    %24 = arith.maximumf %22, %23 : vector<64x8xf32>
    %25 = math.exp %24 : vector<64x8xf32>
    %cst_16 = arith.constant dense<0.000000e+00> : vector<64xf32>
    %26 = vector.multi_reduction <add>, %25, %cst_16 [1] : vector<64x8xf32> to vector<64xf32>
    %27 = vector.shape_cast %26 : vector<64xf32> to vector<64x1xf32>
    %28 = tpu.reciprocal %27 {approx = true} : vector<64x1xf32> -> vector<64x1xf32>
    %29 = vector.broadcast %28 : vector<64x1xf32> to vector<64x8xf32>
    %30 = arith.mulf %25, %29 : vector<64x8xf32>
    %cst_17 = arith.constant dense<0.000000e+00> : vector<64x32xf32>
    %31 = tpu.matmul %30, %3, %cst_17 {dimension_numbers = #tpu.dot_dimension_numbers<[1], [0], [0], [1], [0, 0, 1, 1], [], []>} : vector<64x8xf32>, vector<8x32xf32>, vector<64x32xf32> -> vector<64x32xf32>
    %c0_18 = arith.constant 0 : index
    %c0_19 = arith.constant 0 : index
    %c0_20 = arith.constant 0 : index
    %32 = vector.load %arg6[%c0_18, %c0_19, %c0_20] : memref<1x64x32xf32, #tpu.memory_space<vmem>>, vector<1x64x32xf32>
    %33 = vector.shape_cast %32 : vector<1x64x32xf32> to vector<64x32xf32>
    %34 = vector.shape_cast %31 : vector<64x32xf32> to vector<1x64x32xf32>
    tpu.vector_store %arg6[%c0_18, %c0_19, %c0_20], %34 {strides = array<i32>} : memref<1x64x32xf32, #tpu.memory_space<vmem>>, vector<1x64x32xf32>,
    return
  }
  func.func @transform_0(%arg0: i32, %arg1: i32) -> (i32, i32, i32) {
    %c0_i32 = arith.constant 0 : i32
    %c0_i32_0 = arith.constant 0 : i32
    return %arg0, %arg1, %c0_i32 : i32, i32, i32
  }
  func.func @transform_1(%arg0: i32, %arg1: i32) -> (i32, i32, i32) {
    %c0_i32 = arith.constant 0 : i32
    %c0_i32_0 = arith.constant 0 : i32
    %c0_i32_1 = arith.constant 0 : i32
    return %arg0, %c0_i32, %c0_i32_0 : i32, i32, i32
  }
  func.func @transform_2(%arg0: i32, %arg1: i32) -> (i32, i32, i32) {
    %c0_i32 = arith.constant 0 : i32
    %c0_i32_0 = arith.constant 0 : i32
    return %arg0, %arg1, %c0_i32 : i32, i32, i32
  }
  func.func @transform_3(%arg0: i32, %arg1: i32) -> (i32, i32, i32) {
    %c0_i32 = arith.constant 0 : i32
    %c0_i32_0 = arith.constant 0 : i32
    %c0_i32_1 = arith.constant 0 : i32
    return %arg0, %c0_i32, %c0_i32_0 : i32, i32, i32
  }
  func.func @transform_4(%arg0: i32, %arg1: i32) -> (i32, i32, i32) {
    %c0_i32 = arith.constant 0 : i32
    %c0_i32_0 = arith.constant 0 : i32
    return %arg0, %arg1, %c0_i32 : i32, i32, i32
  }
}

</mosaic_0001>

<llo_original>
// kernel: tpu_custom_call.1
$region0: #{tpu_custom_call.1}
  #allocation0 [shape = 'u32[]', space=smem, size = 0x4, offset = 0x4, fixed_abs, tag = 'smem constant byte address 0x4 - core index']
  #allocation1 [shape = 'u32[72,128]{1,0:T(1,128)}', space=vmem, size = 0x9000, scoped, tag = 'internal scratch']
  %s0 = inlined_call_operand.vmem [shape: f32[2,64,32], index: 0, kind: input, shape index: {}]
  %s1 = inlined_call_operand.vmem [shape: f32[2,8,32], index: 1, kind: input, shape index: {}]
  %s2 = inlined_call_operand.vmem [shape: f32[2,64,1], index: 2, kind: input, shape index: {}]
  %s3 = inlined_call_operand.vmem [shape: f32[2,1,8], index: 3, kind: input, shape index: {}]
  %s4 = inlined_call_operand.vmem [shape: f32[2,64,32], index: 4, kind: output, shape index: {}]
  %s5 = sld [smem:[#allocation0]]
  $region49: #{tpu_custom_call.1} parent=0
    _
  %s7 = ssub.s32 1, %s5
  %s8 = scalar_select 0, %s7, %s5
  loop: start=0, step=1, limit=4
  $region2: #{tpu_custom_call.1} parent=0 // loop_pre_header
    _
  $region3: #{tpu_custom_call.1} parent=0 // loop_header
    %s10 = sphi 0, %s14
    %p11 = scmp.ge.s32.totalorder %s10, 4
    %s17 = sphi 0, %s29
    %s18 = sphi 0, %s25
    %s19 = sphi 0, %s17
    %s20 = sphi 0, %s18
    %s21 = sphi 0, %s19
    %s22 = sphi 0, %s20
    %s34 = sphi 0, %s36
    %s37 = sphi 0, %s34
    %s38 = sphi 0, %s37
    %s54 = sphi 0, %s38
    %s60 = sphi 0, %s62
    %s63 = sphi 0, %s60
    %s64 = sphi 0, %s63
    %s80 = sphi 0, %s64
    %s88 = sphi 0, %s90
    %s91 = sphi 0, %s88
    %s92 = sphi 0, %s91
    %s108 = sphi 0, %s92
    %s114 = sphi 0, %s116
    %s117 = sphi 0, %s114
    %s118 = sphi 0, %s117
    %s134 = sphi 0, %s118
    %s142 = sphi 0, %s144
    %s145 = sphi 0, %s142
    %s146 = sphi 0, %s145
    %s162 = sphi 0, %s146
  $region4: #{tpu_custom_call.1} parent=0 // loop_header_branch
    %13 = sbr.rel (%p11) target = $region8
  $region5: #{tpu_custom_call.1} parent=0 // loop_body
    %s15 = ssub.s32 %s10, 1
    %s16 = ssub.s32 %s10, 2
    %s23 = sadd.s32 1, %s18
    %p24 = scmp.ge.s32.totalorder %s23, 1
    %s25 = scalar_select %p24, 0, %s23
    %s26 = sadd.s32 1, %s17
    %s27 = scalar_select %p24, %s26, %s17
    %p28 = scmp.ge.s32.totalorder %s27, 2
    %s29 = scalar_select %p28, 0, %s27
    %s30 = ssub.s32 %s17, %s29
    %s31 = ssub.s32 %s18, %s25
    %s32 = sor.u32 %s30, %s31
    %p33 = scmp.eq.s32.totalorder %s32, 0
    %s35 = sadd.s32 %s34, 1
    %s36 = scalar_select %p33, %s34, %s35
    %p39 = pneg %p33
    %p40 = scmp.eq.s32.totalorder %s10, 1
    %p41 = por %p39, %p40
    %p42 = scmp.ne.s32.totalorder %s34, %s37
    %p43 = scmp.eq.s32.totalorder %s10, 0
    %p44 = por %p42, %p43
    %p45 = scmp.ne.s32.totalorder %s34, %s37
    %p46 = scmp.eq.s32.totalorder %s15, 1
    %p47 = por %p45, %p46
    %p48 = scmp.ne.s32.totalorder %s37, %s38
    %p49 = scmp.eq.s32.totalorder %s15, 0
    %p50 = por %p48, %p49
    %p51 = scmp.ne.s32.totalorder %s37, %s38
    %p52 = scmp.eq.s32.totalorder %s16, 1
    %p53 = por %p51, %p52
    %p55 = scmp.ne.s32.totalorder %s38, %s54
    %p56 = scmp.eq.s32.totalorder %s16, 0
    %p57 = por %p55, %p56
    %s58 = ssub.s32 %s17, %s29
    %p59 = scmp.eq.s32.totalorder %s58, 0
    %s61 = sadd.s32 %s60, 1
    %s62 = scalar_select %p59, %s60, %s61
    %p65 = pneg %p59
    %p66 = scmp.eq.s32.totalorder %s10, 1
    %p67 = por %p65, %p66
    %p68 = scmp.ne.s32.totalorder %s60, %s63
    %p69 = scmp.eq.s32.totalorder %s10, 0
    %p70 = por %p68, %p69
    %p71 = scmp.ne.s32.totalorder %s60, %s63
    %p72 = scmp.eq.s32.totalorder %s15, 1
    %p73 = por %p71, %p72
    %p74 = scmp.ne.s32.totalorder %s63, %s64
    %p75 = scmp.eq.s32.totalorder %s15, 0
    %p76 = por %p74, %p75
    %p77 = scmp.ne.s32.totalorder %s63, %s64
    %p78 = scmp.eq.s32.totalorder %s16, 1
    %p79 = por %p77, %p78
    %p81 = scmp.ne.s32.totalorder %s64, %s80
    %p82 = scmp.eq.s32.totalorder %s16, 0
    %p83 = por %p81, %p82
    %s84 = ssub.s32 %s17, %s29
    %s85 = ssub.s32 %s18, %s25
    %s86 = sor.u32 %s84, %s85
    %p87 = scmp.eq.s32.totalorder %s86, 0
    %s89 = sadd.s32 %s88, 1
    %s90 = scalar_select %p87, %s88, %s89
    %p93 = pneg %p87
    %p94 = scmp.eq.s32.totalorder %s10, 1
    %p95 = por %p93, %p94
    %p96 = scmp.ne.s32.totalorder %s88, %s91
    %p97 = scmp.eq.s32.totalorder %s10, 0
    %p98 = por %p96, %p97
    %p99 = scmp.ne.s32.totalorder %s88, %s91
    %p100 = scmp.eq.s32.totalorder %s15, 1
    %p101 = por %p99, %p100
    %p102 = scmp.ne.s32.totalorder %s91, %s92
    %p103 = scmp.eq.s32.totalorder %s15, 0
    %p104 = por %p102, %p103
    %p105 = scmp.ne.s32.totalorder %s91, %s92
    %p106 = scmp.eq.s32.totalorder %s16, 1
    %p107 = por %p105, %p106
    %p109 = scmp.ne.s32.totalorder %s92, %s108
    %p110 = scmp.eq.s32.totalorder %s16, 0
    %p111 = por %p109, %p110
    %s112 = ssub.s32 %s17, %s29
    %p113 = scmp.eq.s32.totalorder %s112, 0
    %s115 = sadd.s32 %s114, 1
    %s116 = scalar_select %p113, %s114, %s115
    %p119 = pneg %p113
    %p120 = scmp.eq.s32.totalorder %s10, 1
    %p121 = por %p119, %p120
    %p122 = scmp.ne.s32.totalorder %s114, %s117
    %p123 = scmp.eq.s32.totalorder %s10, 0
    %p124 = por %p122, %p123
    %p125 = scmp.ne.s32.totalorder %s114, %s117
    %p126 = scmp.eq.s32.totalorder %s15, 1
    %p127 = por %p125, %p126
    %p128 = scmp.ne.s32.totalorder %s117, %s118
    %p129 = scmp.eq.s32.totalorder %s15, 0
    %p130 = por %p128, %p129
    %p131 = scmp.ne.s32.totalorder %s117, %s118
    %p132 = scmp.eq.s32.totalorder %s16, 1
    %p133 = por %p131, %p132
    %p135 = scmp.ne.s32.totalorder %s118, %s134
    %p136 = scmp.eq.s32.totalorder %s16, 0
    %p137 = por %p135, %p136
    %s138 = ssub.s32 %s17, %s29
    %s139 = ssub.s32 %s18, %s25
    %s140 = sor.u32 %s138, %s139
    %p141 = scmp.eq.s32.totalorder %s140, 0
    %s143 = sadd.s32 %s142, 1
    %s144 = scalar_select %p141, %s142, %s143
    %p147 = pneg %p141
    %p148 = scmp.eq.s32.totalorder %s10, 1
    %p149 = por %p147, %p148
    %p150 = scmp.ne.s32.totalorder %s142, %s145
    %p151 = scmp.eq.s32.totalorder %s10, 0
    %p152 = por %p150, %p151
    %p153 = scmp.ne.s32.totalorder %s142, %s145
    %p154 = scmp.eq.s32.totalorder %s15, 1
    %p155 = por %p153, %p154
    %p156 = scmp.ne.s32.totalorder %s145, %s146
    %p157 = scmp.eq.s32.totalorder %s15, 0
    %p158 = por %p156, %p157
    %p159 = scmp.ne.s32.totalorder %s145, %s146
    %p160 = scmp.eq.s32.totalorder %s16, 1
    %p161 = por %p159, %p160
    %p163 = scmp.ne.s32.totalorder %s146, %s162
    %p164 = scmp.eq.s32.totalorder %s16, 0
    %p165 = por %p163, %p164
    %p166 = scmp.le.s32.totalorder 1, %s10
    %p167 = scmp.lt.s32.totalorder %s10, 3
    %p168 = pnand %p166, %p167
    %p169 = pneg %p168
    // Predicated region
    $region9: #{tpu_custom_call.1} parent=5 // pred_check
      _
    $region10: #{tpu_custom_call.1} parent=5 // pred_check_branch
      %171 = sbr.rel (%p168) target = $region12
    $region11: #{tpu_custom_call.1} parent=5 // pred_region
      %s172 = ssub.s32 %s10, 1
    $region12: #{tpu_custom_call.1} parent=5 // pred_fallthru
      _
    %p173 = scmp.lt.s32.totalorder %s10, 2
    // Predicated region
    $region13: #{tpu_custom_call.1} parent=5 // pred_check
      %p174 = pneg %p173
    $region14: #{tpu_custom_call.1} parent=5 // pred_check_branch
      %176 = sbr.rel (%p174) target = $region16
    $region15: #{tpu_custom_call.1} parent=5 // pred_region
      // Predicated region
      $region17: #{tpu_custom_call.1} parent=15 // pred_check
        %p177 = pneg %p44
      $region18: #{tpu_custom_call.1} parent=15 // pred_check_branch
        %179 = sbr.rel (%p177) target = $region20
      $region19: #{tpu_custom_call.1} parent=15 // pred_region
        %s180 = smul.u32 8, %s18
        %p181 = scmp.lt.s32.totalorder %s17, 1
        %s182 = scalar_select %p181, %s17, 1
        %p183 = scmp.lt.s32.totalorder %s180, 7
        %s184 = scalar_select %p183, %s180, 7
        %s185 = smul.addr %s182, 8
        %s186 = sadd.s32 %s184, %s185
        %s187 = smul.addr %s186, 8
        %s188 = scalar_lea.vmem %s0, %s187
        %s189 = smul.u32 8, %s18
      $region20: #{tpu_custom_call.1} parent=15 // pred_fallthru
        _
      // Predicated region
      $region21: #{tpu_custom_call.1} parent=15 // pred_check
        %p190 = pneg %p70
      $region22: #{tpu_custom_call.1} parent=15 // pred_check_branch
        %192 = sbr.rel (%p190) target = $region24
      $region23: #{tpu_custom_call.1} parent=15 // pred_region
        %p193 = scmp.lt.s32.totalorder %s17, 1
        %s194 = scalar_select %p193, %s17, 1
        %s195 = smul.addr %s194, 8
        %s196 = scalar_lea.vmem %s1, %s195
      $region24: #{tpu_custom_call.1} parent=15 // pred_fallthru
        _
      // Predicated region
      $region25: #{tpu_custom_call.1} parent=15 // pred_check
        %p197 = pneg %p98
      $region26: #{tpu_custom_call.1} parent=15 // pred_check_branch
        %199 = sbr.rel (%p197) target = $region28
      $region27: #{tpu_custom_call.1} parent=15 // pred_region
        %s200 = smul.u32 8, %s18
        %p201 = scmp.lt.s32.totalorder %s17, 1
        %s202 = scalar_select %p201, %s17, 1
        %p203 = scmp.lt.s32.totalorder %s200, 7
        %s204 = scalar_select %p203, %s200, 7
        %s205 = smul.addr %s202, 8
        %s206 = sadd.s32 %s204, %s205
        %s207 = smul.addr %s206, 8
        %s208 = scalar_lea.vmem %s2, %s207
        %s209 = smul.u32 8, %s18
      $region28: #{tpu_custom_call.1} parent=15 // pred_fallthru
        _
      // Predicated region
      $region29: #{tpu_custom_call.1} parent=15 // pred_check
        %p210 = pneg %p124
      $region30: #{tpu_custom_call.1} parent=15 // pred_check_branch
        %212 = sbr.rel (%p210) target = $region32
      $region31: #{tpu_custom_call.1} parent=15 // pred_region
        %p213 = scmp.lt.s32.totalorder %s17, 1
        %s214 = scalar_select %p213, %s17, 1
        %s215 = scalar_lea.vmem %s3, %s214
      $region32: #{tpu_custom_call.1} parent=15 // pred_fallthru
        _
    $region16: #{tpu_custom_call.1} parent=5 // pred_fallthru
      _
    %p216 = scmp.le.s32.totalorder 1, %s10
    %p217 = scmp.lt.s32.totalorder %s10, 3
    %p218 = pnand %p216, %p217
    %p219 = pneg %p218
    // Predicated region
    $region33: #{tpu_custom_call.1} parent=5 // pred_check
      _
    $region34: #{tpu_custom_call.1} parent=5 // pred_check_branch
      %221 = sbr.rel (%p218) target = $region36
    $region35: #{tpu_custom_call.1} parent=5 // pred_region
      %s222 = ssub.s32 %s10, 1
      %s223 = smul.u32 8, %s20
      %p224 = scmp.lt.s32.totalorder %s19, 1
      %s225 = scalar_select %p224, %s19, 1
      %p226 = scmp.lt.s32.totalorder %s223, 7
      %s227 = scalar_select %p226, %s223, 7
      %s228 = smul.addr %s225, 8
      %s229 = sadd.s32 %s227, %s228
      %s230 = smul.addr %s229, 8
      %s231 = scalar_lea.vmem %s0, %s230
      %p232 = pneg %p50
      %p233 = pneg %p47
      %p234 = scmp.lt.s32.totalorder %s19, 1
      %s235 = scalar_select %p234, %s19, 1
      %s236 = smul.addr %s235, 8
      %s237 = scalar_lea.vmem %s1, %s236
      %p238 = pneg %p76
      %p239 = pneg %p73
      %s240 = smul.u32 8, %s20
      %p241 = scmp.lt.s32.totalorder %s19, 1
      %s242 = scalar_select %p241, %s19, 1
      %p243 = scmp.lt.s32.totalorder %s240, 7
      %s244 = scalar_select %p243, %s240, 7
      %s245 = smul.addr %s242, 8
      %s246 = sadd.s32 %s244, %s245
      %s247 = smul.addr %s246, 8
      %s248 = scalar_lea.vmem %s2, %s247
      %p249 = pneg %p104
      %p250 = pneg %p101
      %p251 = scmp.lt.s32.totalorder %s19, 1
      %s252 = scalar_select %p251, %s19, 1
      %s253 = scalar_lea.vmem %s3, %s252
      %p254 = pneg %p130
      %p255 = pneg %p127
      %p256 = pneg %p158
      %p257 = pneg %p155
      %s258 = smul.u32 8, %s20
      %p259 = scmp.lt.s32.totalorder %s19, 1
      %s260 = scalar_select %p259, %s19, 1
      %p261 = scmp.lt.s32.totalorder %s258, 7
      %s262 = scalar_select %p261, %s258, 7
      %s263 = smul.addr %s260, 8
      %s264 = sadd.s32 %s262, %s263
      %s265 = smul.addr %s264, 8
      %s266 = scalar_lea.vmem %s4, %s265
      %s267 = smul.u32 8, %s20
      %p268 = scmp.lt.s32.totalorder %s19, 1
      %s269 = scalar_select %p268, %s19, 1
      %p270 = scmp.lt.s32.totalorder %s267, 7
      %s271 = scalar_select %p270, %s267, 7
      %s272 = smul.addr %s269, 8
      %s273 = sadd.s32 %s271, %s272
      %s274 = smul.addr %s273, 8
      %s275 = scalar_lea.vmem %s0, %s274
      %s276 = smul.u32 8, %s20
      %p277 = scmp.lt.s32.totalorder %s19, 1
      %s278 = scalar_select %p277, %s19, 1
      %s279 = smul.addr %s278, 8
      %s280 = scalar_lea.vmem %s1, %s279
      %s281 = smul.u32 8, %s20
      %p282 = scmp.lt.s32.totalorder %s19, 1
      %s283 = scalar_select %p282, %s19, 1
      %p284 = scmp.lt.s32.totalorder %s281, 7
      %s285 = scalar_select %p284, %s281, 7
      %s286 = smul.addr %s283, 8
      %s287 = sadd.s32 %s285, %s286
      %s288 = smul.addr %s287, 8
      %s289 = scalar_lea.vmem %s2, %s288
      %s290 = smul.u32 8, %s20
      %p291 = scmp.lt.s32.totalorder %s19, 1
      %s292 = scalar_select %p291, %s19, 1
      %s293 = scalar_lea.vmem %s3, %s292
      %s294 = smul.u32 8, %s20
      %p295 = scmp.lt.s32.totalorder %s19, 1
      %s296 = scalar_select %p295, %s19, 1
      %p297 = scmp.lt.s32.totalorder %s294, 7
      %s298 = scalar_select %p297, %s294, 7
      %s299 = smul.addr %s296, 8
      %s300 = sadd.s32 %s298, %s299
      %s301 = smul.addr %s300, 8
      %s302 = scalar_lea.vmem %s4, %s301
      %s303 = smul.u32 8, %s20
      %v304 = vld [vmem:[%s275] sm:$0xff]
      %v305 = vld [vmem:[%s275 + $0x8] sm:$0xff]
      %v306 = vld [vmem:[%s275 + $0x10] sm:$0xff]
      %v307 = vld [vmem:[%s275 + $0x18] sm:$0xff]
      %v308 = vld [vmem:[%s275 + $0x20] sm:$0xff]
      %v309 = vld [vmem:[%s275 + $0x28] sm:$0xff]
      %v310 = vld [vmem:[%s275 + $0x30] sm:$0xff]
      %v311 = vld [vmem:[%s275 + $0x38] sm:$0xff]
      %v312 = vld [vmem:[%s280] sm:$0xff]
      %v313 = vld [vmem:[%s289] sm:$0xff]
      %v314 = vld [vmem:[%s289 + $0x8] sm:$0xff]
      %v315 = vld [vmem:[%s289 + $0x10] sm:$0xff]
      %v316 = vld [vmem:[%s289 + $0x18] sm:$0xff]
      %v317 = vld [vmem:[%s289 + $0x20] sm:$0xff]
      %v318 = vld [vmem:[%s289 + $0x28] sm:$0xff]
      %v319 = vld [vmem:[%s289 + $0x30] sm:$0xff]
      %v320 = vld [vmem:[%s289 + $0x38] sm:$0xff]
      %v321 = vld [vmem:[%s293] sm:$0x1]
      %vm322 = vcmask 261120
      %v324 = vsel %vm322, %v304, 0
      %v327 = vsel %vm322, %v305, 0
      %v330 = vsel %vm322, %v306, 0
      %v333 = vsel %vm322, %v307, 0
      %v336 = vsel %vm322, %v308, 0
      %v339 = vsel %vm322, %v309, 0
      %v342 = vsel %vm322, %v310, 0
      %v345 = vsel %vm322, %v311, 0
      %v348 = vsel %vm322, %v312, 0
      %350 = vmatpush.xpose.msra.mxu0 0.0
      %351 = vmatpush.xpose.msra.mxu0 0.0
      %352 = vmatpush.xpose.msra.mxu0 0.0
      %353 = vmatpush.xpose.msra.mxu0 0.0
      %354 = vmatpush.xpose.msra.mxu0 0.0
      %355 = vmatpush.xpose.msra.mxu0 0.0
      %356 = vmatpush.xpose.msra.mxu0 0.0
      %357 = vmatpush.xpose.msra.mxu0 0.0
      %358 = vmatpush.xpose.msra.mxu0 0.0
      %359 = vmatpush.xpose.msra.mxu0 0.0
      %360 = vmatpush.xpose.msra.mxu0 0.0
      %361 = vmatpush.xpose.msra.mxu0 0.0
      %362 = vmatpush.xpose.msra.mxu0 0.0
      %363 = vmatpush.xpose.msra.mxu0 0.0
      %364 = vmatpush.xpose.msra.mxu0 0.0
      %365 = vmatpush.xpose.msra.mxu0 %v348
      %366 = vmatmul.f32.gmra.mxu0 %v324
      %v367 = vpop.f32.mrf.mxu0
      %v368 = vadd.f32 0.0, %v367
      %369 = vmatmul.f32.gmra.mxu0 %v327
      %v370 = vpop.f32.mrf.mxu0
      %v371 = vadd.f32 0.0, %v370
      %372 = vmatmul.f32.gmra.mxu0 %v330
      %v373 = vpop.f32.mrf.mxu0
      %v374 = vadd.f32 0.0, %v373
      %375 = vmatmul.f32.gmra.mxu0 %v333
      %v376 = vpop.f32.mrf.mxu0
      %v377 = vadd.f32 0.0, %v376
      %378 = vmatmul.f32.gmra.mxu0 %v336
      %v379 = vpop.f32.mrf.mxu0
      %v380 = vadd.f32 0.0, %v379
      %381 = vmatmul.f32.gmra.mxu0 %v339
      %v382 = vpop.f32.mrf.mxu0
      %v383 = vadd.f32 0.0, %v382
      %384 = vmatmul.f32.gmra.mxu0 %v342
      %v385 = vpop.f32.mrf.mxu0
      %v386 = vadd.f32 0.0, %v385
      %387 = vmatmul.f32.gmra.mxu0 %v345
      %v388 = vpop.f32.mrf.mxu0
      %v389 = vadd.f32 0.0, %v388
      %390 = vdwg.mxu0
      %v391 = vmul.f32 %v368, 0.17677669
      %v392 = vmul.f32 %v371, 0.17677669
      %v393 = vmul.f32 %v374, 0.17677669
      %v394 = vmul.f32 %v377, 0.17677669
      %v395 = vmul.f32 %v380, 0.17677669
      %v396 = vmul.f32 %v383, 0.17677669
      %v397 = vmul.f32 %v386, 0.17677669
      %v398 = vmul.f32 %v389, 0.17677669
      %400 = vset.pattern.permute.xlu0 0
      %401 = vperm.xlu0 %400, %v313
      %v402 = vpop.permute.xlu0 %401
      %405 = vset.pattern.permute.xlu0 0
      %406 = vperm.xlu0 %405, %v314
      %v407 = vpop.permute.xlu0 %406
      %410 = vset.pattern.permute.xlu0 0
      %411 = vperm.xlu0 %410, %v315
      %v412 = vpop.permute.xlu0 %411
      %415 = vset.pattern.permute.xlu0 0
      %416 = vperm.xlu0 %415, %v316
      %v417 = vpop.permute.xlu0 %416
      %420 = vset.pattern.permute.xlu0 0
      %421 = vperm.xlu0 %420, %v317
      %v422 = vpop.permute.xlu0 %421
      %425 = vset.pattern.permute.xlu0 0
      %426 = vperm.xlu0 %425, %v318
      %v427 = vpop.permute.xlu0 %426
      %430 = vset.pattern.permute.xlu0 0
      %431 = vperm.xlu0 %430, %v319
      %v432 = vpop.permute.xlu0 %431
      %435 = vset.pattern.permute.xlu0 0
      %436 = vperm.xlu0 %435, %v320
      %v437 = vpop.permute.xlu0 %436
      %v440 = vperm.slane %v321, 0
      %v442 = vmul.f32 %v402, %v440
      %v443 = vmul.f32 %v407, %v440
      %v444 = vmul.f32 %v412, %v440
      %v445 = vmul.f32 %v417, %v440
      %v446 = vmul.f32 %v422, %v440
      %v447 = vmul.f32 %v427, %v440
      %v448 = vmul.f32 %v432, %v440
      %v449 = vmul.f32 %v437, %v440
      %v450 = vsub.f32 1.0, %v442
      %v451 = vsub.f32 1.0, %v443
      %v452 = vsub.f32 1.0, %v444
      %v453 = vsub.f32 1.0, %v445
      %v454 = vsub.f32 1.0, %v446
      %v455 = vsub.f32 1.0, %v447
      %v456 = vsub.f32 1.0, %v448
      %v457 = vsub.f32 1.0, %v449
      %v458 = vmul.f32 %v450, 1e+10
      %v459 = vmul.f32 %v451, 1e+10
      %v460 = vmul.f32 %v452, 1e+10
      %v461 = vmul.f32 %v453, 1e+10
      %v462 = vmul.f32 %v454, 1e+10
      %v463 = vmul.f32 %v455, 1e+10
      %v464 = vmul.f32 %v456, 1e+10
      %v465 = vmul.f32 %v457, 1e+10
      %v466 = vsub.f32 %v391, %v458
      %v467 = vsub.f32 %v392, %v459
      %v468 = vsub.f32 %v393, %v460
      %v469 = vsub.f32 %v394, %v461
      %v470 = vsub.f32 %v395, %v462
      %v471 = vsub.f32 %v396, %v463
      %v472 = vsub.f32 %v397, %v464
      %v473 = vsub.f32 %v398, %v465
      %vm474 = vcmask 64512
      %v475 = vsel %vm474, %v466, -inf
      %476 = vmax.xlane.f32.xlu0 %v475
      %v477 = vpop.xlane.xlu0 %476
      %v478 = vsel %vm474, %v467, -inf
      %479 = vmax.xlane.f32.xlu0 %v478
      %v480 = vpop.xlane.xlu0 %479
      %v481 = vsel %vm474, %v468, -inf
      %482 = vmax.xlane.f32.xlu0 %v481
      %v483 = vpop.xlane.xlu0 %482
      %v484 = vsel %vm474, %v469, -inf
      %485 = vmax.xlane.f32.xlu0 %v484
      %v486 = vpop.xlane.xlu0 %485
      %v487 = vsel %vm474, %v470, -inf
      %488 = vmax.xlane.f32.xlu0 %v487
      %v489 = vpop.xlane.xlu0 %488
      %v490 = vsel %vm474, %v471, -inf
      %491 = vmax.xlane.f32.xlu0 %v490
      %v492 = vpop.xlane.xlu0 %491
      %v493 = vsel %vm474, %v472, -inf
      %494 = vmax.xlane.f32.xlu0 %v493
      %v495 = vpop.xlane.xlu0 %494
      %v496 = vsel %vm474, %v473, -inf
      %497 = vmax.xlane.f32.xlu0 %v496
      %v498 = vpop.xlane.xlu0 %497
      %v499 = vsub.f32 %v466, %v477
      %v500 = vsub.f32 %v467, %v480
      %v501 = vsub.f32 %v468, %v483
      %v502 = vsub.f32 %v469, %v486
      %v503 = vsub.f32 %v470, %v489
      %v504 = vsub.f32 %v471, %v492
      %v505 = vsub.f32 %v472, %v495
      %v506 = vsub.f32 %v473, %v498
      %v507 = vmax.f32 %v499, -10000.0
      %v508 = vmax.f32 %v500, -10000.0
      %v509 = vmax.f32 %v501, -10000.0
      %v510 = vmax.f32 %v502, -10000.0
      %v511 = vmax.f32 %v503, -10000.0
      %v512 = vmax.f32 %v504, -10000.0
      %v513 = vmax.f32 %v505, -10000.0
      %v514 = vmax.f32 %v506, -10000.0
      %v515 = vmul.f32 %v507, 1.442695
      %v516 = vpow.pop %v515
      %v517 = vmul.f32 %v508, 1.442695
      %v518 = vpow.pop %v517
      %v519 = vmul.f32 %v509, 1.442695
      %v520 = vpow.pop %v519
      %v521 = vmul.f32 %v510, 1.442695
      %v522 = vpow.pop %v521
      %v523 = vmul.f32 %v511, 1.442695
      %v524 = vpow.pop %v523
      %v525 = vmul.f32 %v512, 1.442695
      %v526 = vpow.pop %v525
      %v527 = vmul.f32 %v513, 1.442695
      %v528 = vpow.pop %v527
      %v529 = vmul.f32 %v514, 1.442695
      %v530 = vpow.pop %v529
      %v531 = vsel %vm474, %v516, 0.0
      %532 = vadd.xlane.f32.xlu0 %v531
      %v533 = vpop.xlane.xlu0 %532
      %v534 = vsel %vm474, %v518, 0.0
      %535 = vadd.xlane.f32.xlu0 %v534
      %v536 = vpop.xlane.xlu0 %535
      %v537 = vsel %vm474, %v520, 0.0
      %538 = vadd.xlane.f32.xlu0 %v537
      %v539 = vpop.xlane.xlu0 %538
      %v540 = vsel %vm474, %v522, 0.0
      %541 = vadd.xlane.f32.xlu0 %v540
      %v542 = vpop.xlane.xlu0 %541
      %v543 = vsel %vm474, %v524, 0.0
      %544 = vadd.xlane.f32.xlu0 %v543
      %v545 = vpop.xlane.xlu0 %544
      %v546 = vsel %vm474, %v526, 0.0
      %547 = vadd.xlane.f32.xlu0 %v546
      %v548 = vpop.xlane.xlu0 %547
      %v549 = vsel %vm474, %v528, 0.0
      %550 = vadd.xlane.f32.xlu0 %v549
      %v551 = vpop.xlane.xlu0 %550
      %v552 = vsel %vm474, %v530, 0.0
      %553 = vadd.xlane.f32.xlu0 %v552
      %v554 = vpop.xlane.xlu0 %553
      %v555 = vrcp.pop %v533
      %v556 = vrcp.pop %v536
      %v557 = vrcp.pop %v539
      %v558 = vrcp.pop %v542
      %v559 = vrcp.pop %v545
      %v560 = vrcp.pop %v548
      %v561 = vrcp.pop %v551
      %v562 = vrcp.pop %v554
      %v563 = vmul.f32 %v516, %v555
      %v564 = vmul.f32 %v518, %v556
      %v565 = vmul.f32 %v520, %v557
      %v566 = vmul.f32 %v522, %v558
      %v567 = vmul.f32 %v524, %v559
      %v568 = vmul.f32 %v526, %v560
      %v569 = vmul.f32 %v528, %v561
      %v570 = vmul.f32 %v530, %v562
      %v572 = vsel %vm474, %v563, 0
      %v575 = vsel %vm474, %v564, 0
      %v578 = vsel %vm474, %v565, 0
      %v581 = vsel %vm474, %v566, 0
      %v584 = vsel %vm474, %v567, 0
      %v587 = vsel %vm474, %v568, 0
      %v590 = vsel %vm474, %v569, 0
      %v593 = vsel %vm474, %v570, 0
      %595 = vmatpush.msra.mxu0 0.0
      %596 = vmatpush.msra.mxu0 0.0
      %597 = vmatpush.msra.mxu0 0.0
      %598 = vmatpush.msra.mxu0 0.0
      %599 = vmatpush.msra.mxu0 0.0
      %600 = vmatpush.msra.mxu0 0.0
      %601 = vmatpush.msra.mxu0 0.0
      %602 = vmatpush.msra.mxu0 0.0
      %603 = vmatpush.msra.mxu0 0.0
      %604 = vmatpush.msra.mxu0 0.0
      %605 = vmatpush.msra.mxu0 0.0
      %606 = vmatpush.msra.mxu0 0.0
      %607 = vmatpush.msra.mxu0 0.0
      %608 = vmatpush.msra.mxu0 0.0
      %609 = vmatpush.msra.mxu0 0.0
      %610 = vmatpush.msra.mxu0 %v312
      %611 = vmatmul.f32.gmra.mxu0 %v572
      %v612 = vpop.f32.mrf.mxu0
      %v613 = vadd.f32 0.0, %v612
      %614 = vmatmul.f32.gmra.mxu0 %v575
      %v615 = vpop.f32.mrf.mxu0
      %v616 = vadd.f32 0.0, %v615
      %617 = vmatmul.f32.gmra.mxu0 %v578
      %v618 = vpop.f32.mrf.mxu0
      %v619 = vadd.f32 0.0, %v618
      %620 = vmatmul.f32.gmra.mxu0 %v581
      %v621 = vpop.f32.mrf.mxu0
      %v622 = vadd.f32 0.0, %v621
      %623 = vmatmul.f32.gmra.mxu0 %v584
      %v624 = vpop.f32.mrf.mxu0
      %v625 = vadd.f32 0.0, %v624
      %626 = vmatmul.f32.gmra.mxu0 %v587
      %v627 = vpop.f32.mrf.mxu0
      %v628 = vadd.f32 0.0, %v627
      %629 = vmatmul.f32.gmra.mxu0 %v590
      %v630 = vpop.f32.mrf.mxu0
      %v631 = vadd.f32 0.0, %v630
      %632 = vmatmul.f32.gmra.mxu0 %v593
      %v633 = vpop.f32.mrf.mxu0
      %v634 = vadd.f32 0.0, %v633
      %635 = vdwg.mxu0
      %636 = vst.msk [vmem:[%s302] sm:$0xff] %vm322, %v613
      %637 = vst.msk [vmem:[%s302 + $0x8] sm:$0xff] %vm322, %v616
      %638 = vst.msk [vmem:[%s302 + $0x10] sm:$0xff] %vm322, %v619
      %639 = vst.msk [vmem:[%s302 + $0x18] sm:$0xff] %vm322, %v622
      %640 = vst.msk [vmem:[%s302 + $0x20] sm:$0xff] %vm322, %v625
      %641 = vst.msk [vmem:[%s302 + $0x28] sm:$0xff] %vm322, %v628
      %642 = vst.msk [vmem:[%s302 + $0x30] sm:$0xff] %vm322, %v631
      %643 = vst.msk [vmem:[%s302 + $0x38] sm:$0xff] %vm322, %v634
      %s644 = smul.u32 8, %s20
      %p645 = scmp.lt.s32.totalorder %s19, 1
      %s646 = scalar_select %p645, %s19, 1
      %p647 = scmp.lt.s32.totalorder %s644, 7
      %s648 = scalar_select %p647, %s644, 7
      %s649 = smul.addr %s646, 8
      %s650 = sadd.s32 %s648, %s649
      %s651 = smul.addr %s650, 8
      %s652 = scalar_lea.vmem %s4, %s651
      // Predicated region
      $region37: #{tpu_custom_call.1} parent=35 // pred_check
        %p653 = pneg %p155
      $region38: #{tpu_custom_call.1} parent=35 // pred_check_branch
        %655 = sbr.rel (%p653) target = $region40
      $region39: #{tpu_custom_call.1} parent=35 // pred_region
        %s656 = smul.u32 8, %s20
      $region40: #{tpu_custom_call.1} parent=35 // pred_fallthru
        _
    $region36: #{tpu_custom_call.1} parent=5 // pred_fallthru
      _
    %p657 = scmp.le.s32.totalorder 2, %s10
    // Predicated region
    $region41: #{tpu_custom_call.1} parent=5 // pred_check
      %p658 = pneg %p657
    $region42: #{tpu_custom_call.1} parent=5 // pred_check_branch
      %660 = sbr.rel (%p658) target = $region44
    $region43: #{tpu_custom_call.1} parent=5 // pred_region
      %s661 = ssub.s32 %s10, 2
      // Predicated region
      $region45: #{tpu_custom_call.1} parent=43 // pred_check
        %p662 = pneg %p161
      $region46: #{tpu_custom_call.1} parent=43 // pred_check_branch
        %664 = sbr.rel (%p662) target = $region48
      $region47: #{tpu_custom_call.1} parent=43 // pred_region
        %s665 = smul.u32 8, %s22
        %p666 = scmp.lt.s32.totalorder %s21, 1
        %s667 = scalar_select %p666, %s21, 1
        %p668 = scmp.lt.s32.totalorder %s665, 7
        %s669 = scalar_select %p668, %s665, 7
        %s670 = smul.addr %s667, 8
        %s671 = sadd.s32 %s669, %s670
        %s672 = smul.addr %s671, 8
        %s673 = scalar_lea.vmem %s4, %s672
      $region48: #{tpu_custom_call.1} parent=43 // pred_fallthru
        _
    $region44: #{tpu_custom_call.1} parent=5 // pred_fallthru
      _
  $region6: #{tpu_custom_call.1} parent=0 // loop_footer
    %s14 = sadd.s32 1, %s10
  $region7: #{tpu_custom_call.1} parent=0 // loop_footer_branch
    %9 = sbr.rel target = $region3
  $region8: #{tpu_custom_call.1} parent=0 // loop_exit
    _

</llo_original>
